<compile_context>
chip_gen: v6e
topology: v6e:2x2x1
jax: 0.10.0
libtpu: 0.0.40
codegen_flags: <defaults>
</compile_context>

<pallas_src>
import functools

import jax
import jax.numpy as jnp
from jax.experimental import pallas as pl
from jax.experimental.pallas import tpu as pltpu


def _round_up(x, m):
    return ((x + m - 1) // m) * m


def _joint_loss_kernel(logits_ref, tgt_ref, out_ref, acc_ref, *, inv_n):
    # logits_ref: (3, C, TN) block; tgt_ref: (1, TN) int32;
    # out_ref / acc_ref: (1, 1) float32.
    i = pl.program_id(0)

    @pl.when(i == 0)
    def _():
        acc_ref[...] = jnp.zeros_like(acc_ref)

    tgt = tgt_ref[...]                                     # (1, TN) int32
    valid = (tgt >= 0).astype(jnp.float32)                 # (1, TN): masks padded tail

    c = logits_ref.shape[1]
    tn = logits_ref.shape[2]
    cls = jax.lax.broadcasted_iota(jnp.int32, (c, tn), 0)  # (C, TN)
    onehot = cls == tgt                                    # built once, reused 3x

    m_sum = jnp.zeros((1, tn), jnp.float32)                # sum of per-head maxes
    s_prod = jnp.ones((1, tn), jnp.float32)                # product of per-head sum-exp
    picked = jnp.zeros((1, tn), jnp.float32)               # sum of picked logits
    for k in range(3):                                     # static unroll: fused 3-way CE
        xk = logits_ref[k].astype(jnp.float32)             # (C, TN) aligned slab, upcast
        m = jnp.max(xk, axis=0, keepdims=True)             # (1, TN)   XLU
        s = jnp.sum(jnp.exp(xk - m), axis=0, keepdims=True)  # exp on EUP, sum on XLU
        m_sum = m_sum + m
        s_prod = s_prod * s                                # s in [1, C]: no overflow
        picked = picked + jnp.sum(jnp.where(onehot, xk, 0.0), axis=0, keepdims=True)

    # Single log per sample for all three heads; per-sample NLL summed over heads.
    per_n = m_sum + jnp.log(s_prod) - picked               # (1, TN)

    # Accumulate raw (unnormalized) sum across batch tiles.
    acc_ref[...] += jnp.sum(per_n * valid, keepdims=True)

    @pl.when(i == pl.num_programs(0) - 1)
    def _():
        out_ref[...] = acc_ref[...] * jnp.float32(inv_n)


def joint_loss(p1, p2, p3, target, *, tile_n=2048):
    """p1, p2, p3: (N, C) logits (any float dtype); target: (N,) int class ids."""
    n, c = p1.shape
    tn = min(tile_n, _round_up(n, 128))
    n_pad = _round_up(n, tn)
    grid = n_pad // tn

    # Fuse the three CE passes into one DMA stream: stack to (3, C, N) so the
    # batch dim fills the lane axis.  Native dtype is kept (bf16 passes
    # through, the f32 upcast happens per-tile inside the kernel).
    x = jnp.stack([p1, p2, p3], axis=0)                    # (3, N, C)
    x = jnp.transpose(x, (0, 2, 1))                        # (3, C, N)
    x = jnp.pad(x, ((0, 0), (0, 0), (0, n_pad - n)))
    t = jnp.pad(target.astype(jnp.int32), (0, n_pad - n), constant_values=-1)
    t = t.reshape(1, n_pad)

    kernel = functools.partial(_joint_loss_kernel, inv_n=1.0 / n)
    out = pl.pallas_call(
        kernel,
        out_shape=jax.ShapeDtypeStruct((1, 1), jnp.float32),
        grid_spec=pltpu.PrefetchScalarGridSpec(
            num_scalar_prefetch=0,
            grid=(grid,),
            in_specs=[
                pl.BlockSpec((3, c, tn), lambda i: (0, 0, i)),
                pl.BlockSpec((1, tn), lambda i: (0, i)),
            ],
            out_specs=pl.BlockSpec((1, 1), lambda i: (0, 0)),
            scratch_shapes=[pltpu.VMEM((1, 1), jnp.float32)],
        ),
        compiler_params=pltpu.CompilerParams(
            # Accumulator is carried across the batch grid -> reduction axis.
            dimension_semantics=("arbitrary",)),
    )(x, t)
    return out[0, 0]


def _reference(p1, p2, p3, target):
    def ce(logits, t):
        logp = jax.nn.log_softmax(logits.astype(jnp.float32), axis=-1)
        return -jnp.mean(jnp.take_along_axis(logp, t[:, None], axis=-1))
    return ce(p1, target) + ce(p3, target) + ce(p2, target)


if __name__ == "__main__":
    # Case 1: CK+-like tiny config (7 emotion classes).
    k1, k2, k3, k4 = jax.random.split(jax.random.PRNGKey(0), 4)
    N, C = 8, 7
    p1 = jax.random.normal(k1, (N, C), dtype=jnp.float32)
    p2 = jax.random.normal(k2, (N, C), dtype=jnp.float32)
    p3 = jax.random.normal(k3, (N, C), dtype=jnp.float32)
    target = jax.random.randint(k4, (N,), 0, C, dtype=jnp.int32)

    out = joint_loss(p1, p2, p3, target)
    jax.block_until_ready(out)
    ref = _reference(p1, p2, p3, target)
    assert jnp.allclose(out, ref, atol=1e-4, rtol=1e-4), (out, ref)

    # Case 2: exercises the batch grid (3 tiles of 128) + tail-padding mask +
    # the cross-tile accumulator / finalize path.
    k5, k6, k7, k8 = jax.random.split(jax.random.PRNGKey(1), 4)
    N2, C2 = 300, 7
    q1 = jax.random.normal(k5, (N2, C2), dtype=jnp.float32)
    q2 = jax.random.normal(k6, (N2, C2), dtype=jnp.float32)
    q3 = jax.random.normal(k7, (N2, C2), dtype=jnp.float32)
    t2 = jax.random.randint(k8, (N2,), 0, C2, dtype=jnp.int32)

    out2 = joint_loss(q1, q2, q3, t2, tile_n=128)
    jax.block_until_ready(out2)
    ref2 = _reference(q1, q2, q3, t2)
    assert jnp.allclose(out2, ref2, atol=1e-4, rtol=1e-4), (out2, ref2)

    print("KERNEL_OK")
</pallas_src>

<mosaic_0001>
module attributes {stable_mosaic.version = 11 : i64} {
  func.func @_joint_loss_kernel(%arg0: i32, %arg1: memref<3x7x128xf32, #tpu.memory_space<vmem>>, %arg2: memref<1x128xi32, #tpu.memory_space<vmem>>, %arg3: memref<1x1xf32, #tpu.memory_space<vmem>>, %arg4: memref<1x1xf32, #tpu.memory_space<vmem>>) attributes {dimension_semantics = [#tpu.dimension_semantics<arbitrary>], iteration_bounds = array<i64: 1>, scalar_prefetch = 0 : i64, scratch_operands = 1 : i64, tpu.core_type = #tpu.core_type<tc>, window_params = [{transform_indices = @transform_0, window_bounds = array<i64: 3, 7, 128>}, {transform_indices = @transform_1, window_bounds = array<i64: 1, 128>}, {pipeline_mode = #tpu.pipeline_mode<synchronous>, transform_indices = @transform_2, window_bounds = array<i64: 1, 1>}]} {
    %c0_i32 = arith.constant 0 : i32
    %0 = arith.cmpi eq, %arg0, %c0_i32 : i32
    %1 = arith.extui %0 : i1 to i32
    %c0_i32_0 = arith.constant 0 : i32
    %2 = arith.cmpi ne, %1, %c0_i32_0 : i32
    scf.if %2 {
      %cst_31 = arith.constant 0.000000e+00 : f32
      %77 = vector.broadcast %cst_31 : f32 to vector<1x1xf32>
      %c0_32 = arith.constant 0 : index
      %c0_33 = arith.constant 0 : index
      %78 = vector.load %arg4[%c0_32, %c0_33] : memref<1x1xf32, #tpu.memory_space<vmem>>, vector<1x1xf32>
      tpu.vector_store %arg4[%c0_32, %c0_33], %77 {strides = array<i32>} : memref<1x1xf32, #tpu.memory_space<vmem>>, vector<1x1xf32>,
    } else {
    }
    %c0 = arith.constant 0 : index
    %c0_1 = arith.constant 0 : index
    %3 = vector.load %arg2[%c0, %c0_1] : memref<1x128xi32, #tpu.memory_space<vmem>>, vector<1x128xi32>
    %c0_i32_2 = arith.constant 0 : i32
    %4 = vector.broadcast %c0_i32_2 : i32 to vector<1x128xi32>
    %5 = arith.cmpi sge, %3, %4 : vector<1x128xi32>
    %6 = arith.extui %5 : vector<1x128xi1> to vector<1x128xi32>
    %7 = arith.sitofp %6 : vector<1x128xi32> to vector<1x128xf32>
    %8 = tpu.iota {dimensions = array<i32: 0>} : vector<7x128xi32>
    %9 = vector.broadcast %3 : vector<1x128xi32> to vector<7x128xi32>
    %10 = arith.cmpi eq, %8, %9 : vector<7x128xi32>
    %cst = arith.constant 0.000000e+00 : f32
    %11 = vector.broadcast %cst : f32 to vector<1x128xf32>
    %cst_3 = arith.constant 1.000000e+00 : f32
    %12 = vector.broadcast %cst_3 : f32 to vector<1x128xf32>
    %cst_4 = arith.constant 0.000000e+00 : f32
    %13 = vector.broadcast %cst_4 : f32 to vector<1x128xf32>
    %c0_5 = arith.constant 0 : index
    %c0_6 = arith.constant 0 : index
    %c0_7 = arith.constant 0 : index
    %14 = vector.load %arg1[%c0_5, %c0_6, %c0_7] : memref<3x7x128xf32, #tpu.memory_space<vmem>>, vector<1x7x128xf32>
    %15 = vector.shape_cast %14 : vector<1x7x128xf32> to vector<7x128xf32>
    %cst_8 = arith.constant dense<0xFF800000> : vector<128xf32>
    %16 = vector.multi_reduction <maximumf>, %15, %cst_8 [0] : vector<7x128xf32> to vector<128xf32>
    %17 = vector.shape_cast %16 : vector<128xf32> to vector<1x128xf32>
    %18 = vector.broadcast %17 : vector<1x128xf32> to vector<7x128xf32>
    %19 = arith.subf %15, %18 : vector<7x128xf32>
    %20 = math.exp %19 : vector<7x128xf32>
    %cst_9 = arith.constant dense<0.000000e+00> : vector<128xf32>
    %21 = vector.multi_reduction <add>, %20, %cst_9 [0] : vector<7x128xf32> to vector<128xf32>
    %22 = vector.shape_cast %21 : vector<128xf32> to vector<1x128xf32>
    %23 = arith.addf %11, %17 : vector<1x128xf32>
    %24 = arith.mulf %12, %22 : vector<1x128xf32>
    %cst_10 = arith.constant 0.000000e+00 : f32
    %25 = vector.broadcast %cst_10 : f32 to vector<7x128xf32>
    %26 = arith.select %10, %15, %25 : vector<7x128xi1>, vector<7x128xf32>
    %cst_11 = arith.constant dense<0.000000e+00> : vector<128xf32>
    %27 = vector.multi_reduction <add>, %26, %cst_11 [0] : vector<7x128xf32> to vector<128xf32>
    %28 = vector.shape_cast %27 : vector<128xf32> to vector<1x128xf32>
    %29 = arith.addf %13, %28 : vector<1x128xf32>
    %c1 = arith.constant 1 : index
    %c0_12 = arith.constant 0 : index
    %c0_13 = arith.constant 0 : index
    %30 = vector.load %arg1[%c1, %c0_12, %c0_13] : memref<3x7x128xf32, #tpu.memory_space<vmem>>, vector<1x7x128xf32>
    %31 = vector.shape_cast %30 : vector<1x7x128xf32> to vector<7x128xf32>
    %cst_14 = arith.constant dense<0xFF800000> : vector<128xf32>
    %32 = vector.multi_reduction <maximumf>, %31, %cst_14 [0] : vector<7x128xf32> to vector<128xf32>
    %33 = vector.shape_cast %32 : vector<128xf32> to vector<1x128xf32>
    %34 = vector.broadcast %33 : vector<1x128xf32> to vector<7x128xf32>
    %35 = arith.subf %31, %34 : vector<7x128xf32>
    %36 = math.exp %35 : vector<7x128xf32>
    %cst_15 = arith.constant dense<0.000000e+00> : vector<128xf32>
    %37 = vector.multi_reduction <add>, %36, %cst_15 [0] : vector<7x128xf32> to vector<128xf32>
    %38 = vector.shape_cast %37 : vector<128xf32> to vector<1x128xf32>
    %39 = arith.addf %23, %33 : vector<1x128xf32>
    %40 = arith.mulf %24, %38 : vector<1x128xf32>
    %cst_16 = arith.constant 0.000000e+00 : f32
    %41 = vector.broadcast %cst_16 : f32 to vector<7x128xf32>
    %42 = arith.select %10, %31, %41 : vector<7x128xi1>, vector<7x128xf32>
    %cst_17 = arith.constant dense<0.000000e+00> : vector<128xf32>
    %43 = vector.multi_reduction <add>, %42, %cst_17 [0] : vector<7x128xf32> to vector<128xf32>
    %44 = vector.shape_cast %43 : vector<128xf32> to vector<1x128xf32>
    %45 = arith.addf %29, %44 : vector<1x128xf32>
    %c2 = arith.constant 2 : index
    %c0_18 = arith.constant 0 : index
    %c0_19 = arith.constant 0 : index
    %46 = vector.load %arg1[%c2, %c0_18, %c0_19] : memref<3x7x128xf32, #tpu.memory_space<vmem>>, vector<1x7x128xf32>
    %47 = vector.shape_cast %46 : vector<1x7x128xf32> to vector<7x128xf32>
    %cst_20 = arith.constant dense<0xFF800000> : vector<128xf32>
    %48 = vector.multi_reduction <maximumf>, %47, %cst_20 [0] : vector<7x128xf32> to vector<128xf32>
    %49 = vector.shape_cast %48 : vector<128xf32> to vector<1x128xf32>
    %50 = vector.broadcast %49 : vector<1x128xf32> to vector<7x128xf32>
    %51 = arith.subf %47, %50 : vector<7x128xf32>
    %52 = math.exp %51 : vector<7x128xf32>
    %cst_21 = arith.constant dense<0.000000e+00> : vector<128xf32>
    %53 = vector.multi_reduction <add>, %52, %cst_21 [0] : vector<7x128xf32> to vector<128xf32>
    %54 = vector.shape_cast %53 : vector<128xf32> to vector<1x128xf32>
    %55 = arith.addf %39, %49 : vector<1x128xf32>
    %56 = arith.mulf %40, %54 : vector<1x128xf32>
    %cst_22 = arith.constant 0.000000e+00 : f32
    %57 = vector.broadcast %cst_22 : f32 to vector<7x128xf32>
    %58 = arith.select %10, %47, %57 : vector<7x128xi1>, vector<7x128xf32>
    %cst_23 = arith.constant dense<0.000000e+00> : vector<128xf32>
    %59 = vector.multi_reduction <add>, %58, %cst_23 [0] : vector<7x128xf32> to vector<128xf32>
    %60 = vector.shape_cast %59 : vector<128xf32> to vector<1x128xf32>
    %61 = arith.addf %45, %60 : vector<1x128xf32>
    %62 = math.log %56 : vector<1x128xf32>
    %63 = arith.addf %55, %62 : vector<1x128xf32>
    %64 = arith.subf %63, %61 : vector<1x128xf32>
    %c0_24 = arith.constant 0 : index
    %c0_25 = arith.constant 0 : index
    %65 = vector.load %arg4[%c0_24, %c0_25] : memref<1x1xf32, #tpu.memory_space<vmem>>, vector<1x1xf32>
    %66 = arith.mulf %64, %7 : vector<1x128xf32>
    %67 = vector.shape_cast %66 : vector<1x128xf32> to vector<1x1x128xf32>
    %cst_26 = arith.constant dense<0.000000e+00> : vector<1xf32>
    %68 = vector.multi_reduction <add>, %67, %cst_26 [1, 2] : vector<1x1x128xf32> to vector<1xf32>
    %69 = vector.shape_cast %68 : vector<1xf32> to vector<1x1x1xf32>
    %70 = vector.extract %69[0, 0, 0] : f32 from vector<1x1x1xf32>
    %71 = vector.broadcast %70 : f32 to vector<1x1xf32>
    %72 = arith.addf %65, %71 : vector<1x1xf32>
    %c0_27 = arith.constant 0 : index
    %c0_28 = arith.constant 0 : index
    %73 = vector.load %arg4[%c0_27, %c0_28] : memref<1x1xf32, #tpu.memory_space<vmem>>, vector<1x1xf32>
    tpu.vector_store %arg4[%c0_27, %c0_28], %72 {strides = array<i32>} : memref<1x1xf32, #tpu.memory_space<vmem>>, vector<1x1xf32>,
    %c0_i32_29 = arith.constant 0 : i32
    %74 = arith.cmpi eq, %arg0, %c0_i32_29 : i32
    %75 = arith.extui %74 : i1 to i32
    %c0_i32_30 = arith.constant 0 : i32
    %76 = arith.cmpi ne, %75, %c0_i32_30 : i32
    scf.if %76 {
      %c0_31 = arith.constant 0 : index
      %c0_32 = arith.constant 0 : index
      %77 = vector.load %arg4[%c0_31, %c0_32] : memref<1x1xf32, #tpu.memory_space<vmem>>, vector<1x1xf32>
      %cst_33 = arith.constant 1.250000e-01 : f32
      %78 = vector.broadcast %cst_33 : f32 to vector<1x1xf32>
      %79 = arith.mulf %77, %78 : vector<1x1xf32>
      %c0_34 = arith.constant 0 : index
      %c0_35 = arith.constant 0 : index
      %80 = vector.load %arg3[%c0_34, %c0_35] : memref<1x1xf32, #tpu.memory_space<vmem>>, vector<1x1xf32>
      tpu.vector_store %arg3[%c0_34, %c0_35], %79 {strides = array<i32>} : memref<1x1xf32, #tpu.memory_space<vmem>>, vector<1x1xf32>,
    } else {
    }
    return
  }
  func.func @transform_0(%arg0: i32) -> (i32, i32, i32) {
    %c0_i32 = arith.constant 0 : i32
    %c0_i32_0 = arith.constant 0 : i32
    %c0_i32_1 = arith.constant 0 : i32
    return %c0_i32, %c0_i32_0, %arg0 : i32, i32, i32
  }
  func.func @transform_1(%arg0: i32) -> (i32, i32) {
    %c0_i32 = arith.constant 0 : i32
    %c0_i32_0 = arith.constant 0 : i32
    return %c0_i32, %arg0 : i32, i32
  }
  func.func @transform_2(%arg0: i32) -> (i32, i32) {
    %c0_i32 = arith.constant 0 : i32
    %c0_i32_0 = arith.constant 0 : i32
    %c0_i32_1 = arith.constant 0 : i32
    return %c0_i32, %c0_i32_0 : i32, i32
  }
}

</mosaic_0001>

<llo_original>
// kernel: tpu_custom_call.1
$region0: #{tpu_custom_call.1}
  #allocation0 [shape = 'u32[]', space=smem, size = 0x4, offset = 0x4, fixed_abs, tag = 'smem constant byte address 0x4 - core index']
  #allocation1 [shape = 'u32[144,128]{1,0:T(1,128)}', space=vmem, size = 0x12000, scoped, tag = 'internal scratch']
  #allocation2 [shape = 'f32[1,1]{1,0:T(1,128)}', space=vmem, size = 0x200, scoped, tag = 'scratch operand']
  %s0 = inlined_call_operand.hbm [shape: f32[3,7,128], index: 0, kind: input, shape index: {}]
  %s1 = inlined_call_operand.vmem [shape: s32[1,128], index: 1, kind: input, shape index: {}]
  %s2 = inlined_call_operand.hbm [shape: f32[1,1], index: 2, kind: output, shape index: {}]
  %s3 = sld [smem:[#allocation0]]
  $region30: #{tpu_custom_call.1} parent=0
    _
  %s5 = ssub.s32 1, %s3
  %s6 = scalar_select 0, %s5, %s3
  $region1: #{tpu_custom_call.1} parent=0
    #allocation3 [shape = 'u8[12288]{0}', space=vmem, size = 0x3000, scoped, tag = 'input window, operand 0, single buffered']
    #allocation4 [shape = 's32[1]{0}', space=sflag, size = 0x4, scoped, tag = 'scoped memory for tpu_custom_call.1']
    #allocation5 [shape = 's32[1]{0}', space=sflag, size = 0x4, scoped, tag = 'scoped memory for tpu_custom_call.1']
    #allocation6 [shape = 'u8[512]{0}', space=vmem, size = 0x400, scoped, tag = 'output window, operand 0, single buffered']
    %7 = vsyncpa [#allocation4], 0
    %8 = vsyncpa [#allocation5], 0
    // Predicated region
    $region2: #{tpu_custom_call.1} parent=1 // pred_check
      _
    $region3: #{tpu_custom_call.1} parent=1 // pred_check_branch
      %10 = sbr.rel (0) target = $region5
    $region4: #{tpu_custom_call.1} parent=1 // pred_region
      %s12 = ssub.s32 384, 384
      %13 = vsyncadd [#allocation4], %s12
      %s14 = sshll.u32 [#allocation3], 4
      %s15 = int_to_ptr.vmem [resolvable:$true] %s14
      %20 = dma.hbm_to_vmem [thread:$0]  %s0, 384, %s15, [#allocation4], 128, 128, 8
    $region5: #{tpu_custom_call.1} parent=1 // pred_fallthru
      _
    // Predicated region
    $region6: #{tpu_custom_call.1} parent=1 // pred_check
      _
    $region7: #{tpu_custom_call.1} parent=1 // pred_check_branch
      %22 = sbr.rel (0) target = $region9
    $region8: #{tpu_custom_call.1} parent=1 // pred_region
      _
    $region9: #{tpu_custom_call.1} parent=1 // pred_fallthru
      _
    // Predicated region
    $region10: #{tpu_custom_call.1} parent=1 // pred_check
      _
    $region11: #{tpu_custom_call.1} parent=1 // pred_check_branch
      %24 = sbr.rel (0) target = $region13
    $region12: #{tpu_custom_call.1} parent=1 // pred_region
      %25 = dma.done [#allocation4], 384
    $region13: #{tpu_custom_call.1} parent=1 // pred_fallthru
      _
    %p26 = scmp.eq.s32.totalorder 0, 0
    // Predicated region
    $region14: #{tpu_custom_call.1} parent=1 // pred_check
      %p27 = pneg %p26
    $region15: #{tpu_custom_call.1} parent=1 // pred_check_branch
      %29 = sbr.rel (%p27) target = $region17
    $region16: #{tpu_custom_call.1} parent=1 // pred_region
      %vm30 = vcmask 0
      %31 = vst.msk [vmem:[#allocation2] sm:$0x1] %vm30, 0.0
    $region17: #{tpu_custom_call.1} parent=1 // pred_fallthru
      _
    %v32 = vld [vmem:[%s1] sm:$0x1]
    %vm33 = vcmp.ge.s32.totalorder %v32, 0
    %v34 = vsel %vm33, 1, 0
    %v35 = vcvt.s32.f32 %v34
    %v36 = vlaneseq
    %v37 = vshrl.u32 %v36, 7
    %v38 = vlaneseq
    %v39 = vshrl.u32 %v38, 7
    %v40 = vsub.s32 0, %v39
    %v41 = vrot.slane %v32, %v40
    %vm42 = vcmp.eq.s32.totalorder %v37, %v41
    %v43 = vld [vmem:[#allocation3] sm:$0x7f]
    %vm44 = vcmask 1046528
    %v45 = vsel %vm44, %v43, -inf
    %v46 = vrot.slane %v45, 4
    %v47 = vmax.f32 %v45, %v46
    %v48 = vrot.slane %v47, 2
    %v49 = vmax.f32 %v47, %v48
    %v50 = vrot.slane %v49, 1
    %v51 = vmax.f32 %v49, %v50
    %v52 = vsub.f32 %v43, %v51
    %v53 = vmul.f32 %v52, 1.442695
    %v54 = vpow.pop %v53
    %v55 = vsel %vm44, %v54, 0.0
    %v56 = vrot.slane %v55, 4
    %v57 = vadd.f32 %v55, %v56
    %v58 = vrot.slane %v57, 2
    %v59 = vadd.f32 %v57, %v58
    %v60 = vrot.slane %v59, 1
    %v61 = vadd.f32 %v59, %v60
    %v62 = vadd.f32 %v51, 0.0
    %v63 = vsel %vm42, %v43, 0.0
    %v64 = vsel %vm44, %v63, 0.0
    %v65 = vrot.slane %v64, 4
    %v66 = vadd.f32 %v64, %v65
    %v67 = vrot.slane %v66, 2
    %v68 = vadd.f32 %v66, %v67
    %v69 = vrot.slane %v68, 1
    %v70 = vadd.f32 %v68, %v69
    %v71 = vadd.f32 %v70, 0.0
    %s72 = scalar_lea.vmem [#allocation3], 8
    %v73 = vld [vmem:[%s72] sm:$0x7f]
    %v74 = vsel %vm44, %v73, -inf
    %v75 = vrot.slane %v74, 4
    %v76 = vmax.f32 %v74, %v75
    %v77 = vrot.slane %v76, 2
    %v78 = vmax.f32 %v76, %v77
    %v79 = vrot.slane %v78, 1
    %v80 = vmax.f32 %v78, %v79
    %v81 = vsub.f32 %v73, %v80
    %v82 = vmul.f32 %v81, 1.442695
    %v83 = vpow.pop %v82
    %v84 = vsel %vm44, %v83, 0.0
    %v85 = vrot.slane %v84, 4
    %v86 = vadd.f32 %v84, %v85
    %v87 = vrot.slane %v86, 2
    %v88 = vadd.f32 %v86, %v87
    %v89 = vrot.slane %v88, 1
    %v90 = vadd.f32 %v88, %v89
    %v91 = vadd.f32 %v62, %v80
    %v92 = vmul.f32 %v61, %v90
    %v93 = vsel %vm42, %v73, 0.0
    %v94 = vsel %vm44, %v93, 0.0
    %v95 = vrot.slane %v94, 4
    %v96 = vadd.f32 %v94, %v95
    %v97 = vrot.slane %v96, 2
    %v98 = vadd.f32 %v96, %v97
    %v99 = vrot.slane %v98, 1
    %v100 = vadd.f32 %v98, %v99
    %v101 = vadd.f32 %v71, %v100
    %s102 = scalar_lea.vmem [#allocation3], 16
    %v103 = vld [vmem:[%s102] sm:$0x7f]
    %v104 = vsel %vm44, %v103, -inf
    %v105 = vrot.slane %v104, 4
    %v106 = vmax.f32 %v104, %v105
    %v107 = vrot.slane %v106, 2
    %v108 = vmax.f32 %v106, %v107
    %v109 = vrot.slane %v108, 1
    %v110 = vmax.f32 %v108, %v109
    %v111 = vsub.f32 %v103, %v110
    %v112 = vmul.f32 %v111, 1.442695
    %v113 = vpow.pop %v112
    %v114 = vsel %vm44, %v113, 0.0
    %v115 = vrot.slane %v114, 4
    %v116 = vadd.f32 %v114, %v115
    %v117 = vrot.slane %v116, 2
    %v118 = vadd.f32 %v116, %v117
    %v119 = vrot.slane %v118, 1
    %v120 = vadd.f32 %v118, %v119
    %v121 = vadd.f32 %v91, %v110
    %v122 = vmul.f32 %v92, %v120
    %v123 = vsel %vm42, %v103, 0.0
    %v124 = vsel %vm44, %v123, 0.0
    %v125 = vrot.slane %v124, 4
    %v126 = vadd.f32 %v124, %v125
    %v127 = vrot.slane %v126, 2
    %v128 = vadd.f32 %v126, %v127
    %v129 = vrot.slane %v128, 1
    %v130 = vadd.f32 %v128, %v129
    %v131 = vadd.f32 %v101, %v130
    %v132 = vlog2.pop %v122
    %v133 = vmul.f32 %v132, 0.6931472
    %v134 = vadd.f32 %v121, %v133
    %v135 = vsub.f32 %v134, %v131
    %v136 = vld [vmem:[#allocation2] sm:$0x1]
    %v137 = vmul.f32 %v135, %v35
    %vm138 = vcmask 1040384
    %v139 = vsel %vm138, %v137, 0.0
    %140 = vadd.xlane.f32.xlu0 %v139
    %v141 = vpop.xlane.xlu0 %140
    %v142 = vrot.slane %v141, 4
    %v143 = vadd.f32 %v141, %v142
    %v144 = vrot.slane %v143, 2
    %v145 = vadd.f32 %v143, %v144
    %v146 = vrot.slane %v145, 1
    %v147 = vadd.f32 %v145, %v146
    %s148 = vtos %v147
    %v149 = vstv %s148
    %v150 = vadd.f32 %v136, %v149
    %vm151 = vcmask 0
    %152 = vst.msk [vmem:[#allocation2] sm:$0x1] %vm151, %v150
    // Predicated region
    $region18: #{tpu_custom_call.1} parent=1 // pred_check
      %p153 = pneg %p26
    $region19: #{tpu_custom_call.1} parent=1 // pred_check_branch
      %155 = sbr.rel (%p153) target = $region21
    $region20: #{tpu_custom_call.1} parent=1 // pred_region
      %v156 = vld [vmem:[#allocation2] sm:$0x1]
      %v157 = vmul.f32 %v156, 0.125
      %158 = vst.msk [vmem:[#allocation6] sm:$0x1] %vm151, %v157
    $region21: #{tpu_custom_call.1} parent=1 // pred_fallthru
      _
    // Predicated region
    $region22: #{tpu_custom_call.1} parent=1 // pred_check
      _
    $region23: #{tpu_custom_call.1} parent=1 // pred_check_branch
      %160 = sbr.rel (0) target = $region25
    $region24: #{tpu_custom_call.1} parent=1 // pred_region
      %s162 = ssub.s32 16, 16
      %163 = vsyncadd [#allocation5], %s162
      %s165 = sshll.u32 [#allocation6], 4
      %s166 = int_to_ptr.vmem [resolvable:$true] %s165
      %168 = dma.vmem_to_hbm [thread:$0]  %s166, 16, %s2, [#allocation5]
    $region25: #{tpu_custom_call.1} parent=1 // pred_fallthru
      _
    // Predicated region
    $region26: #{tpu_custom_call.1} parent=1 // pred_check
      _
    $region27: #{tpu_custom_call.1} parent=1 // pred_check_branch
      %170 = sbr.rel (0) target = $region29
    $region28: #{tpu_custom_call.1} parent=1 // pred_region
      %171 = dma.done [#allocation5], 16
    $region29: #{tpu_custom_call.1} parent=1 // pred_fallthru
      _
    %172 = vsyncpa [#allocation4], 1
    %173 = vsyncpa [#allocation5], 1

</llo_original>
